<compile_context>
chip_gen: v7x
topology: tpu7x:2x2x1
jax: 0.10.0
libtpu: 0.0.40
codegen_flags: <defaults>
</compile_context>

<pallas_src>
import functools

import jax
import jax.numpy as jnp
from jax import lax
from jax.experimental import pallas as pl
from jax.experimental.pallas import tpu as pltpu


def _newton_recip(d):
    # Approx EUP reciprocal + one Newton-Raphson step -> ~f32 accuracy, cheap VALU.
    r = pl.reciprocal(d, approx=True)
    return r * (2.0 - d * r)


def _mish(z):
    # z * tanh(softplus(z)) with a single exp, overflow-safe for large |z|.
    #   z <= 0 (t = e^z):   tanh(softplus(z)) = (2t + t^2) / (2 + 2t + t^2)
    #   z >  0 (t = e^-z):  tanh(softplus(z)) = (1 + 2t) / (1 + 2t + 2t^2)
    t = jnp.exp(-jnp.abs(z))
    t2 = t * t
    num = jnp.where(z > 0, 1.0 + 2.0 * t, 2.0 * t + t2)
    den = jnp.where(z > 0, 1.0 + 2.0 * t + 2.0 * t2, 2.0 + 2.0 * t + t2)
    return z * num * _newton_recip(den)


def _project_tiles(x_ref, y_ref, w_ref, shift_ref):
    # Shared 1x1-conv + folded-BN projection of the x and y tiles.
    # Two back-to-back small dots keep the (D, C) weight resident between them
    # (a lane-axis concat would add an in-VMEM copy of both tiles for no gain
    # in this HBM-bound kernel).
    w = w_ref[...]                                                   # (D, C)
    shift = shift_ref[...]                                           # (D, 1)
    zx = jnp.dot(w, x_ref[0], preferred_element_type=jnp.float32)    # (D, TN)
    zy = jnp.dot(w, y_ref[0], preferred_element_type=jnp.float32)    # (D, TN)
    return _mish(zx + shift), _mish(zy + shift)


def _energy_kernel(x_ref, y_ref, w_ref, shift_ref, beta_ref,
                   attn_xy_ref, attn_yx_t_ref, e_acc, *, n_valid):
    # Grid (B, NT): batch "parallel", N-tile "arbitrary" (reduction into e_acc).
    t = pl.program_id(1)

    @pl.when(t == 0)
    def _():
        e_acc[...] = jnp.zeros_like(e_acc)

    qx, qy = _project_tiles(x_ref, y_ref, w_ref, shift_ref)          # (D, TN) x2

    if n_valid is not None:
        # Ragged N: zero the zero-padded tail columns so they do not contribute
        # to the energy sum (outputs on padded columns are sliced off on host).
        tn = x_ref.shape[2]
        col = t * tn + lax.broadcasted_iota(jnp.int32, (1, tn), 1)
        valid = col < n_valid
        qx = jnp.where(valid, qx, 0.0)
        qy = jnp.where(valid, qy, 0.0)

    # energy += qx @ qy^T  (contract the lane/N axis; no materialized transpose)
    nt_dims = (((1,), (1,)), ((), ()))
    e_acc[...] += lax.dot_general(qx, qy, nt_dims,
                                  preferred_element_type=jnp.float32)

    @pl.when(t == pl.num_programs(1) - 1)
    def _():
        e = e_acc[...]
        beta = beta_ref[0]
        # attention_xy = row-softmax(E); attention_yx^T = column-softmax(E).
        # Fold the beta scale in so pass 2 needs no scalar argument.
        p_r = jnp.exp(e - jnp.max(e, axis=-1, keepdims=True))
        attn_xy_ref[0] = (beta * p_r *
                          _newton_recip(jnp.sum(p_r, axis=-1, keepdims=True)))
        p_c = jnp.exp(e - jnp.max(e, axis=0, keepdims=True))
        attn_yx_t_ref[0] = (beta * p_c *
                            _newton_recip(jnp.sum(p_c, axis=0, keepdims=True)))


def _output_kernel(x_ref, y_ref, w_ref, shift_ref, attn_xy_ref, attn_yx_t_ref,
                   out_x_ref, out_y_ref):
    # Grid (B, NT), fully parallel: each step produces one lane-dense output tile.
    qx, qy = _project_tiles(x_ref, y_ref, w_ref, shift_ref)          # (D, TN) x2

    # out_x = (beta*attn_xy) @ qx + qx
    out_x = jnp.dot(attn_xy_ref[0], qx,
                    preferred_element_type=jnp.float32) + qx
    # out_y = (beta*attn_yx) @ qy + qy   via "TN" dot on attn_yx^T (no transpose)
    tn_dims = (((0,), (0,)), ((), ()))
    out_y = lax.dot_general(attn_yx_t_ref[0], qy, tn_dims,
                            preferred_element_type=jnp.float32) + qy

    out_x_ref[0] = out_x.astype(out_x_ref.dtype)
    out_y_ref[0] = out_y.astype(out_y_ref.dtype)


def self_attention_fc_forward(x, y, w, bn_gamma, bn_beta, bn_mean, bn_var, beta,
                              eps=1e-5, tile_n=None):
    B, C, N = x.shape
    D = w.shape[0]

    # Fold eval-mode BatchNorm scale into the conv weight; the shift stays as a
    # per-row (D, 1) bias applied in-kernel (tiny host-side weight math only --
    # no host-side passes over x / y).
    inv_std = lax.rsqrt(bn_var.astype(jnp.float32) + jnp.float32(eps))
    scale = bn_gamma.astype(jnp.float32) * inv_std                          # (D,)
    w_s = w.astype(jnp.float32) * scale[:, None]                            # (D, C)
    shift = (bn_beta.astype(jnp.float32)
             - bn_mean.astype(jnp.float32) * scale)[:, None]                # (D, 1)
    beta_arr = jnp.asarray(beta, jnp.float32).reshape(1)

    # Lane tiling over N: big (>=512, default 1024) lane-dense tiles amortize
    # per-grid-step overhead; per-step VMEM working set stays O((C+D)*TN*4).
    if tile_n is None:
        tile_n = 1024
    n_128 = ((N + 127) // 128) * 128
    tn = max(128, (min(tile_n, n_128) // 128) * 128)
    n_pad = ((N + tn - 1) // tn) * tn
    nt = n_pad // tn

    if n_pad != N:
        pad = ((0, 0), (0, 0), (0, n_pad - N))
        x = jnp.pad(x, pad)
        y = jnp.pad(y, pad)
    n_valid = N if n_pad != N else None

    out_dtype = x.dtype
    vmem_limit = 32 * 1024 * 1024   # explicit; safe on v5e/v6e/v7x, tiny actual use

    # ---- Pass 1: accumulate (D, D) energy per batch, finalize both softmaxes ----
    attn_xy, attn_yx_t = pl.pallas_call(
        functools.partial(_energy_kernel, n_valid=n_valid),
        out_shape=(jax.ShapeDtypeStruct((B, D, D), jnp.float32),
                   jax.ShapeDtypeStruct((B, D, D), jnp.float32)),
        grid=(B, nt),
        in_specs=[
            pl.BlockSpec((1, C, tn), lambda b, t: (b, 0, t)),
            pl.BlockSpec((1, C, tn), lambda b, t: (b, 0, t)),
            pl.BlockSpec((D, C), lambda b, t: (0, 0)),
            pl.BlockSpec((D, 1), lambda b, t: (0, 0)),
            pl.BlockSpec(memory_space=pltpu.MemorySpace.SMEM),
        ],
        out_specs=(
            pl.BlockSpec((1, D, D), lambda b, t: (b, 0, 0)),
            pl.BlockSpec((1, D, D), lambda b, t: (b, 0, 0)),
        ),
        scratch_shapes=[pltpu.VMEM((D, D), jnp.float32)],
        compiler_params=pltpu.CompilerParams(
            dimension_semantics=("parallel", "arbitrary"),
            vmem_limit_bytes=vmem_limit),
    )(x, y, w_s, shift, beta_arr)

    # ---- Pass 2: re-project per tile and emit beta*attn@q + q, lane-dense ----
    out_x, out_y = pl.pallas_call(
        _output_kernel,
        out_shape=(jax.ShapeDtypeStruct((B, D, n_pad), out_dtype),
                   jax.ShapeDtypeStruct((B, D, n_pad), out_dtype)),
        grid=(B, nt),
        in_specs=[
            pl.BlockSpec((1, C, tn), lambda b, t: (b, 0, t)),
            pl.BlockSpec((1, C, tn), lambda b, t: (b, 0, t)),
            pl.BlockSpec((D, C), lambda b, t: (0, 0)),
            pl.BlockSpec((D, 1), lambda b, t: (0, 0)),
            pl.BlockSpec((1, D, D), lambda b, t: (b, 0, 0)),
            pl.BlockSpec((1, D, D), lambda b, t: (b, 0, 0)),
        ],
        out_specs=(
            pl.BlockSpec((1, D, tn), lambda b, t: (b, 0, t)),
            pl.BlockSpec((1, D, tn), lambda b, t: (b, 0, t)),
        ),
        compiler_params=pltpu.CompilerParams(
            dimension_semantics=("parallel", "parallel"),
            vmem_limit_bytes=vmem_limit),
    )(x, y, w_s, shift, attn_xy, attn_yx_t)

    if n_pad != N:
        out_x = out_x[:, :, :N]
        out_y = out_y[:, :, :N]
    return out_x, out_y


def _reference(x, y, w, bn_gamma, bn_beta, bn_mean, bn_var, beta, eps=1e-5):
    inv_std = 1.0 / jnp.sqrt(bn_var + eps)

    def proj(v):
        z = jnp.einsum('dc,bcn->bdn', w, v)
        z = z * (bn_gamma * inv_std)[None, :, None] + \
            (bn_beta - bn_mean * bn_gamma * inv_std)[None, :, None]
        return z * jnp.tanh(jax.nn.softplus(z))

    qx = proj(x)                                          # (B, D, N)
    qy = proj(y)                                          # (B, D, N)
    energy = jnp.einsum('bdn,ben->bde', qx, qy)           # (B, D, D)
    attn_xy = jax.nn.softmax(energy, axis=-1)
    attn_yx = jax.nn.softmax(jnp.swapaxes(energy, 1, 2), axis=-1)
    out_x = beta * jnp.einsum('bde,ben->bdn', attn_xy, qx) + qx
    out_y = beta * jnp.einsum('bde,ben->bdn', attn_yx, qy) + qy
    return out_x, out_y


if __name__ == "__main__":
    # Small demo shapes; odd B + ragged N + tile_n=128 deliberately exercise the
    # multi-tile energy accumulation, the pl.when init/finalize and the padded-
    # column masking path.  Production defaults use 1024-wide lane tiles.
    B, C_IN, D_OUT, N = 3, 8, 16, 320

    key = jax.random.PRNGKey(0)
    kx, ky, kw, kg, kb, km, kv = jax.random.split(key, 7)

    x = jax.random.normal(kx, (B, C_IN, N), dtype=jnp.float32)
    y = jax.random.normal(ky, (B, C_IN, N), dtype=jnp.float32)

    # Conv1d(in_dim, out_dim, kernel_size=1, bias=False) weight: (D, C)
    w = 0.1 * jax.random.normal(kw, (D_OUT, C_IN), dtype=jnp.float32)
    # BatchNorm1d(out_dim) parameters (eval-mode semantics).
    bn_gamma = 1.0 + 0.1 * jax.random.normal(kg, (D_OUT,), dtype=jnp.float32)
    bn_beta = 0.1 * jax.random.normal(kb, (D_OUT,), dtype=jnp.float32)
    bn_mean = 0.1 * jax.random.normal(km, (D_OUT,), dtype=jnp.float32)
    bn_var = jnp.abs(1.0 + 0.1 * jax.random.normal(kv, (D_OUT,), dtype=jnp.float32))
    # nn.Parameter(torch.zeros(1)); nonzero so the attention branch is exercised.
    beta = 0.5

    out_x, out_y = self_attention_fc_forward(
        x, y, w, bn_gamma, bn_beta, bn_mean, bn_var, beta, tile_n=128)
    jax.block_until_ready((out_x, out_y))

    ref_x, ref_y = _reference(x, y, w, bn_gamma, bn_beta, bn_mean, bn_var, beta)
    assert out_x.shape == ref_x.shape and out_y.shape == ref_y.shape
    assert jnp.allclose(out_x, ref_x, atol=5e-4, rtol=5e-4)
    assert jnp.allclose(out_y, ref_y, atol=5e-4, rtol=5e-4)

    print("KERNEL_OK")
</pallas_src>

<mosaic_0001>
module attributes {stable_mosaic.version = 11 : i64} {
  func.func @_energy_kernel(%arg0: i32, %arg1: i32, %arg2: memref<1x8x128xf32, #tpu.memory_space<vmem>>, %arg3: memref<1x8x128xf32, #tpu.memory_space<vmem>>, %arg4: memref<16x8xf32, #tpu.memory_space<vmem>>, %arg5: memref<16x1xf32, #tpu.memory_space<vmem>>, %arg6: memref<1xf32, #tpu.memory_space<smem>>, %arg7: memref<1x16x16xf32, #tpu.memory_space<vmem>>, %arg8: memref<1x16x16xf32, #tpu.memory_space<vmem>>, %arg9: memref<16x16xf32, #tpu.memory_space<vmem>>) attributes {dimension_semantics = [#tpu.dimension_semantics<parallel>, #tpu.dimension_semantics<arbitrary>], iteration_bounds = array<i64: 3, 3>, scalar_prefetch = 0 : i64, scratch_operands = 1 : i64, tpu.core_type = #tpu.core_type<tc>, window_params = [{transform_indices = @transform_0, window_bounds = array<i64: 1, 8, 128>}, {transform_indices = @transform_1, window_bounds = array<i64: 1, 8, 128>}, {pipeline_mode = #tpu.pipeline_mode<synchronous>, transform_indices = @transform_2, window_bounds = array<i64: 16, 8>}, {pipeline_mode = #tpu.pipeline_mode<synchronous>, transform_indices = @transform_3, window_bounds = array<i64: 16, 1>}, {transform_indices = @transform_4, window_bounds = array<i64: 1>}, {transform_indices = @transform_5, window_bounds = array<i64: 1, 16, 16>}, {transform_indices = @transform_6, window_bounds = array<i64: 1, 16, 16>}]} {
    %c0_i32 = arith.constant 0 : i32
    %0 = arith.cmpi eq, %arg1, %c0_i32 : i32
    %1 = arith.extui %0 : i1 to i32
    %c0_i32_0 = arith.constant 0 : i32
    %2 = arith.cmpi ne, %1, %c0_i32_0 : i32
    scf.if %2 {
      %cst_43 = arith.constant 0.000000e+00 : f32
      %110 = vector.broadcast %cst_43 : f32 to vector<16x16xf32>
      %c0_44 = arith.constant 0 : index
      %c0_45 = arith.constant 0 : index
      %111 = vector.load %arg9[%c0_44, %c0_45] : memref<16x16xf32, #tpu.memory_space<vmem>>, vector<16x16xf32>
      tpu.vector_store %arg9[%c0_44, %c0_45], %110 {strides = array<i32>} : memref<16x16xf32, #tpu.memory_space<vmem>>, vector<16x16xf32>,
    } else {
    }
    %c0 = arith.constant 0 : index
    %c0_1 = arith.constant 0 : index
    %3 = vector.load %arg4[%c0, %c0_1] : memref<16x8xf32, #tpu.memory_space<vmem>>, vector<16x8xf32>
    %c0_2 = arith.constant 0 : index
    %c0_3 = arith.constant 0 : index
    %4 = vector.load %arg5[%c0_2, %c0_3] : memref<16x1xf32, #tpu.memory_space<vmem>>, vector<16x1xf32>
    %c0_4 = arith.constant 0 : index
    %c0_5 = arith.constant 0 : index
    %c0_6 = arith.constant 0 : index
    %5 = vector.load %arg2[%c0_4, %c0_5, %c0_6] : memref<1x8x128xf32, #tpu.memory_space<vmem>>, vector<1x8x128xf32>
    %6 = vector.shape_cast %5 : vector<1x8x128xf32> to vector<8x128xf32>
    %cst = arith.constant dense<0.000000e+00> : vector<16x128xf32>
    %7 = tpu.matmul %3, %6, %cst {dimension_numbers = #tpu.dot_dimension_numbers<[1], [0], [0], [1], [0, 0, 1, 1], [], []>} : vector<16x8xf32>, vector<8x128xf32>, vector<16x128xf32> -> vector<16x128xf32>
    %c0_7 = arith.constant 0 : index
    %c0_8 = arith.constant 0 : index
    %c0_9 = arith.constant 0 : index
    %8 = vector.load %arg3[%c0_7, %c0_8, %c0_9] : memref<1x8x128xf32, #tpu.memory_space<vmem>>, vector<1x8x128xf32>
    %9 = vector.shape_cast %8 : vector<1x8x128xf32> to vector<8x128xf32>
    %cst_10 = arith.constant dense<0.000000e+00> : vector<16x128xf32>
    %10 = tpu.matmul %3, %9, %cst_10 {dimension_numbers = #tpu.dot_dimension_numbers<[1], [0], [0], [1], [0, 0, 1, 1], [], []>} : vector<16x8xf32>, vector<8x128xf32>, vector<16x128xf32> -> vector<16x128xf32>
    %11 = vector.broadcast %4 : vector<16x1xf32> to vector<16x128xf32>
    %12 = arith.addf %7, %11 : vector<16x128xf32>
    %13 = math.absf %12 : vector<16x128xf32>
    %cst_11 = arith.constant 0.000000e+00 : f32
    %14 = vector.broadcast %cst_11 : f32 to vector<16x128xf32>
    %15 = arith.subf %14, %13 : vector<16x128xf32>
    %16 = math.exp %15 : vector<16x128xf32>
    %17 = arith.mulf %16, %16 : vector<16x128xf32>
    %cst_12 = arith.constant 0.000000e+00 : f32
    %18 = vector.broadcast %cst_12 : f32 to vector<16x128xf32>
    %19 = arith.cmpf ogt, %12, %18 : vector<16x128xf32>
    %cst_13 = arith.constant 2.000000e+00 : f32
    %20 = vector.broadcast %cst_13 : f32 to vector<16x128xf32>
    %21 = arith.mulf %20, %16 : vector<16x128xf32>
    %cst_14 = arith.constant 1.000000e+00 : f32
    %22 = vector.broadcast %cst_14 : f32 to vector<16x128xf32>
    %23 = arith.addf %22, %21 : vector<16x128xf32>
    %cst_15 = arith.constant 2.000000e+00 : f32
    %24 = vector.broadcast %cst_15 : f32 to vector<16x128xf32>
    %25 = arith.mulf %24, %16 : vector<16x128xf32>
    %26 = arith.addf %25, %17 : vector<16x128xf32>
    %27 = arith.select %19, %23, %26 : vector<16x128xi1>, vector<16x128xf32>
    %cst_16 = arith.constant 0.000000e+00 : f32
    %28 = vector.broadcast %cst_16 : f32 to vector<16x128xf32>
    %29 = arith.cmpf ogt, %12, %28 : vector<16x128xf32>
    %cst_17 = arith.constant 2.000000e+00 : f32
    %30 = vector.broadcast %cst_17 : f32 to vector<16x128xf32>
    %31 = arith.mulf %30, %16 : vector<16x128xf32>
    %cst_18 = arith.constant 1.000000e+00 : f32
    %32 = vector.broadcast %cst_18 : f32 to vector<16x128xf32>
    %33 = arith.addf %32, %31 : vector<16x128xf32>
    %cst_19 = arith.constant 2.000000e+00 : f32
    %34 = vector.broadcast %cst_19 : f32 to vector<16x128xf32>
    %35 = arith.mulf %34, %17 : vector<16x128xf32>
    %36 = arith.addf %33, %35 : vector<16x128xf32>
    %cst_20 = arith.constant 2.000000e+00 : f32
    %37 = vector.broadcast %cst_20 : f32 to vector<16x128xf32>
    %38 = arith.mulf %37, %16 : vector<16x128xf32>
    %cst_21 = arith.constant 2.000000e+00 : f32
    %39 = vector.broadcast %cst_21 : f32 to vector<16x128xf32>
    %40 = arith.addf %39, %38 : vector<16x128xf32>
    %41 = arith.addf %40, %17 : vector<16x128xf32>
    %42 = arith.select %29, %36, %41 : vector<16x128xi1>, vector<16x128xf32>
    %43 = arith.mulf %12, %27 : vector<16x128xf32>
    %44 = tpu.reciprocal %42 {approx = true} : vector<16x128xf32> -> vector<16x128xf32>
    %45 = arith.mulf %42, %44 : vector<16x128xf32>
    %cst_22 = arith.constant 2.000000e+00 : f32
    %46 = vector.broadcast %cst_22 : f32 to vector<16x128xf32>
    %47 = arith.subf %46, %45 : vector<16x128xf32>
    %48 = arith.mulf %44, %47 : vector<16x128xf32>
    %49 = arith.mulf %43, %48 : vector<16x128xf32>
    %50 = vector.broadcast %4 : vector<16x1xf32> to vector<16x128xf32>
    %51 = arith.addf %10, %50 : vector<16x128xf32>
    %52 = math.absf %51 : vector<16x128xf32>
    %cst_23 = arith.constant 0.000000e+00 : f32
    %53 = vector.broadcast %cst_23 : f32 to vector<16x128xf32>
    %54 = arith.subf %53, %52 : vector<16x128xf32>
    %55 = math.exp %54 : vector<16x128xf32>
    %56 = arith.mulf %55, %55 : vector<16x128xf32>
    %cst_24 = arith.constant 0.000000e+00 : f32
    %57 = vector.broadcast %cst_24 : f32 to vector<16x128xf32>
    %58 = arith.cmpf ogt, %51, %57 : vector<16x128xf32>
    %cst_25 = arith.constant 2.000000e+00 : f32
    %59 = vector.broadcast %cst_25 : f32 to vector<16x128xf32>
    %60 = arith.mulf %59, %55 : vector<16x128xf32>
    %cst_26 = arith.constant 1.000000e+00 : f32
    %61 = vector.broadcast %cst_26 : f32 to vector<16x128xf32>
    %62 = arith.addf %61, %60 : vector<16x128xf32>
    %cst_27 = arith.constant 2.000000e+00 : f32
    %63 = vector.broadcast %cst_27 : f32 to vector<16x128xf32>
    %64 = arith.mulf %63, %55 : vector<16x128xf32>
    %65 = arith.addf %64, %56 : vector<16x128xf32>
    %66 = arith.select %58, %62, %65 : vector<16x128xi1>, vector<16x128xf32>
    %cst_28 = arith.constant 0.000000e+00 : f32
    %67 = vector.broadcast %cst_28 : f32 to vector<16x128xf32>
    %68 = arith.cmpf ogt, %51, %67 : vector<16x128xf32>
    %cst_29 = arith.constant 2.000000e+00 : f32
    %69 = vector.broadcast %cst_29 : f32 to vector<16x128xf32>
    %70 = arith.mulf %69, %55 : vector<16x128xf32>
    %cst_30 = arith.constant 1.000000e+00 : f32
    %71 = vector.broadcast %cst_30 : f32 to vector<16x128xf32>
    %72 = arith.addf %71, %70 : vector<16x128xf32>
    %cst_31 = arith.constant 2.000000e+00 : f32
    %73 = vector.broadcast %cst_31 : f32 to vector<16x128xf32>
    %74 = arith.mulf %73, %56 : vector<16x128xf32>
    %75 = arith.addf %72, %74 : vector<16x128xf32>
    %cst_32 = arith.constant 2.000000e+00 : f32
    %76 = vector.broadcast %cst_32 : f32 to vector<16x128xf32>
    %77 = arith.mulf %76, %55 : vector<16x128xf32>
    %cst_33 = arith.constant 2.000000e+00 : f32
    %78 = vector.broadcast %cst_33 : f32 to vector<16x128xf32>
    %79 = arith.addf %78, %77 : vector<16x128xf32>
    %80 = arith.addf %79, %56 : vector<16x128xf32>
    %81 = arith.select %68, %75, %80 : vector<16x128xi1>, vector<16x128xf32>
    %82 = arith.mulf %51, %66 : vector<16x128xf32>
    %83 = tpu.reciprocal %81 {approx = true} : vector<16x128xf32> -> vector<16x128xf32>
    %84 = arith.mulf %81, %83 : vector<16x128xf32>
    %cst_34 = arith.constant 2.000000e+00 : f32
    %85 = vector.broadcast %cst_34 : f32 to vector<16x128xf32>
    %86 = arith.subf %85, %84 : vector<16x128xf32>
    %87 = arith.mulf %83, %86 : vector<16x128xf32>
    %88 = arith.mulf %82, %87 : vector<16x128xf32>
    %c128_i32 = arith.constant 128 : i32
    %89 = arith.muli %arg1, %c128_i32 : i32
    %90 = tpu.iota {dimensions = array<i32: 1>} : vector<1x128xi32>
    %91 = vector.broadcast %89 : i32 to vector<1x128xi32>
    %92 = arith.addi %91, %90 : vector<1x128xi32>
    %c320_i32 = arith.constant 320 : i32
    %93 = vector.broadcast %c320_i32 : i32 to vector<1x128xi32>
    %94 = arith.cmpi slt, %92, %93 : vector<1x128xi32>
    %cst_35 = arith.constant 0.000000e+00 : f32
    %95 = vector.shape_cast %94 : vector<1x128xi1> to vector<1x128xi1>
    %96 = vector.broadcast %95 : vector<1x128xi1> to vector<16x128xi1>
    %97 = vector.broadcast %cst_35 : f32 to vector<16x128xf32>
    %98 = arith.select %96, %49, %97 : vector<16x128xi1>, vector<16x128xf32>
    %cst_36 = arith.constant 0.000000e+00 : f32
    %99 = vector.shape_cast %94 : vector<1x128xi1> to vector<1x128xi1>
    %100 = vector.broadcast %99 : vector<1x128xi1> to vector<16x128xi1>
    %101 = vector.broadcast %cst_36 : f32 to vector<16x128xf32>
    %102 = arith.select %100, %88, %101 : vector<16x128xi1>, vector<16x128xf32>
    %c0_37 = arith.constant 0 : index
    %c0_38 = arith.constant 0 : index
    %103 = vector.load %arg9[%c0_37, %c0_38] : memref<16x16xf32, #tpu.memory_space<vmem>>, vector<16x16xf32>
    %cst_39 = arith.constant dense<0.000000e+00> : vector<16x16xf32>
    %104 = tpu.matmul %98, %102, %cst_39 {dimension_numbers = #tpu.dot_dimension_numbers<[1], [1], [0], [0], [0, 0, 1, 0], [], []>} : vector<16x128xf32>, vector<16x128xf32>, vector<16x16xf32> -> vector<16x16xf32>
    %105 = arith.addf %103, %104 : vector<16x16xf32>
    %c0_40 = arith.constant 0 : index
    %c0_41 = arith.constant 0 : index
    %106 = vector.load %arg9[%c0_40, %c0_41] : memref<16x16xf32, #tpu.memory_space<vmem>>, vector<16x16xf32>
    tpu.vector_store %arg9[%c0_40, %c0_41], %105 {strides = array<i32>} : memref<16x16xf32, #tpu.memory_space<vmem>>, vector<16x16xf32>,
    %c2_i32 = arith.constant 2 : i32
    %107 = arith.cmpi eq, %arg1, %c2_i32 : i32
    %108 = arith.extui %107 : i1 to i32
    %c0_i32_42 = arith.constant 0 : i32
    %109 = arith.cmpi ne, %108, %c0_i32_42 : i32
    scf.if %109 {
      %c0_43 = arith.constant 0 : index
      %c0_44 = arith.constant 0 : index
      %110 = vector.load %arg9[%c0_43, %c0_44] : memref<16x16xf32, #tpu.memory_space<vmem>>, vector<16x16xf32>
      %c0_45 = arith.constant 0 : index
      %111 = memref.load %arg6[%c0_45] : memref<1xf32, #tpu.memory_space<smem>>
      %cst_46 = arith.constant dense<0xFF800000> : vector<16xf32>
      %112 = vector.multi_reduction <maximumf>, %110, %cst_46 [1] : vector<16x16xf32> to vector<16xf32>
      %113 = vector.shape_cast %112 : vector<16xf32> to vector<16x1xf32>
      %114 = vector.broadcast %113 : vector<16x1xf32> to vector<16x16xf32>
      %115 = arith.subf %110, %114 : vector<16x16xf32>
      %116 = math.exp %115 : vector<16x16xf32>
      %117 = vector.broadcast %111 : f32 to vector<16x16xf32>
      %118 = arith.mulf %117, %116 : vector<16x16xf32>
      %cst_47 = arith.constant dense<0.000000e+00> : vector<16xf32>
      %119 = vector.multi_reduction <add>, %116, %cst_47 [1] : vector<16x16xf32> to vector<16xf32>
      %120 = vector.shape_cast %119 : vector<16xf32> to vector<16x1xf32>
      %121 = tpu.reciprocal %120 {approx = true} : vector<16x1xf32> -> vector<16x1xf32>
      %122 = arith.mulf %120, %121 : vector<16x1xf32>
      %cst_48 = arith.constant 2.000000e+00 : f32
      %123 = vector.broadcast %cst_48 : f32 to vector<16x1xf32>
      %124 = arith.subf %123, %122 : vector<16x1xf32>
      %125 = arith.mulf %121, %124 : vector<16x1xf32>
      %126 = vector.broadcast %125 : vector<16x1xf32> to vector<16x16xf32>
      %127 = arith.mulf %118, %126 : vector<16x16xf32>
      %c0_49 = arith.constant 0 : index
      %c0_50 = arith.constant 0 : index
      %c0_51 = arith.constant 0 : index
      %128 = vector.load %arg7[%c0_49, %c0_50, %c0_51] : memref<1x16x16xf32, #tpu.memory_space<vmem>>, vector<1x16x16xf32>
      %129 = vector.shape_cast %128 : vector<1x16x16xf32> to vector<16x16xf32>
      %130 = vector.shape_cast %127 : vector<16x16xf32> to vector<1x16x16xf32>
      tpu.vector_store %arg7[%c0_49, %c0_50, %c0_51], %130 {strides = array<i32>} : memref<1x16x16xf32, #tpu.memory_space<vmem>>, vector<1x16x16xf32>,
      %cst_52 = arith.constant dense<0xFF800000> : vector<16xf32>
      %131 = vector.multi_reduction <maximumf>, %110, %cst_52 [0] : vector<16x16xf32> to vector<16xf32>
      %132 = vector.shape_cast %131 : vector<16xf32> to vector<1x16xf32>
      %133 = vector.broadcast %132 : vector<1x16xf32> to vector<16x16xf32>
      %134 = arith.subf %110, %133 : vector<16x16xf32>
      %135 = math.exp %134 : vector<16x16xf32>
      %136 = vector.broadcast %111 : f32 to vector<16x16xf32>
      %137 = arith.mulf %136, %135 : vector<16x16xf32>
      %cst_53 = arith.constant dense<0.000000e+00> : vector<16xf32>
      %138 = vector.multi_reduction <add>, %135, %cst_53 [0] : vector<16x16xf32> to vector<16xf32>
      %139 = vector.shape_cast %138 : vector<16xf32> to vector<1x16xf32>
      %140 = tpu.reciprocal %139 {approx = true} : vector<1x16xf32> -> vector<1x16xf32>
      %141 = arith.mulf %139, %140 : vector<1x16xf32>
      %cst_54 = arith.constant 2.000000e+00 : f32
      %142 = vector.broadcast %cst_54 : f32 to vector<1x16xf32>
      %143 = arith.subf %142, %141 : vector<1x16xf32>
      %144 = arith.mulf %140, %143 : vector<1x16xf32>
      %145 = vector.broadcast %144 : vector<1x16xf32> to vector<16x16xf32>
      %146 = arith.mulf %137, %145 : vector<16x16xf32>
      %c0_55 = arith.constant 0 : index
      %c0_56 = arith.constant 0 : index
      %c0_57 = arith.constant 0 : index
      %147 = vector.load %arg8[%c0_55, %c0_56, %c0_57] : memref<1x16x16xf32, #tpu.memory_space<vmem>>, vector<1x16x16xf32>
      %148 = vector.shape_cast %147 : vector<1x16x16xf32> to vector<16x16xf32>
      %149 = vector.shape_cast %146 : vector<16x16xf32> to vector<1x16x16xf32>
      tpu.vector_store %arg8[%c0_55, %c0_56, %c0_57], %149 {strides = array<i32>} : memref<1x16x16xf32, #tpu.memory_space<vmem>>, vector<1x16x16xf32>,
    } else {
    }
    return
  }
  func.func @transform_0(%arg0: i32, %arg1: i32) -> (i32, i32, i32) {
    %c0_i32 = arith.constant 0 : i32
    %c0_i32_0 = arith.constant 0 : i32
    return %arg0, %c0_i32, %arg1 : i32, i32, i32
  }
  func.func @transform_1(%arg0: i32, %arg1: i32) -> (i32, i32, i32) {
    %c0_i32 = arith.constant 0 : i32
    %c0_i32_0 = arith.constant 0 : i32
    return %arg0, %c0_i32, %arg1 : i32, i32, i32
  }
  func.func @transform_2(%arg0: i32, %arg1: i32) -> (i32, i32) {
    %c0_i32 = arith.constant 0 : i32
    %c0_i32_0 = arith.constant 0 : i32
    %c0_i32_1 = arith.constant 0 : i32
    return %c0_i32, %c0_i32_0 : i32, i32
  }
  func.func @transform_3(%arg0: i32, %arg1: i32) -> (i32, i32) {
    %c0_i32 = arith.constant 0 : i32
    %c0_i32_0 = arith.constant 0 : i32
    %c0_i32_1 = arith.constant 0 : i32
    return %c0_i32, %c0_i32_0 : i32, i32
  }
  func.func @transform_4(%arg0: i32, %arg1: i32) -> i32 {
    %c0_i32 = arith.constant 0 : i32
    %c0_i32_0 = arith.constant 0 : i32
    return %c0_i32 : i32
  }
  func.func @transform_5(%arg0: i32, %arg1: i32) -> (i32, i32, i32) {
    %c0_i32 = arith.constant 0 : i32
    %c0_i32_0 = arith.constant 0 : i32
    %c0_i32_1 = arith.constant 0 : i32
    return %arg0, %c0_i32, %c0_i32_0 : i32, i32, i32
  }
  func.func @transform_6(%arg0: i32, %arg1: i32) -> (i32, i32, i32) {
    %c0_i32 = arith.constant 0 : i32
    %c0_i32_0 = arith.constant 0 : i32
    %c0_i32_1 = arith.constant 0 : i32
    return %arg0, %c0_i32, %c0_i32_0 : i32, i32, i32
  }
}

</mosaic_0001>

<llo_original>
// kernel: tpu_custom_call.1
$region0: #{tpu_custom_call.1}
  #allocation0 [shape = 'u32[]', space=smem, size = 0x4, offset = 0x4, fixed_abs, tag = 'smem constant byte address 0x4 - core index']
  #allocation1 [shape = 'u32[144,128]{1,0:T(1,128)}', space=vmem, size = 0x12000, scoped, tag = 'internal scratch']
  #allocation2 [shape = 'f32[16,16]{1,0:T(8,128)}', space=vmem, size = 0x2000, scoped, tag = 'scratch operand']
  #allocation3 [shape = 'f32[1]{0:T(128)S(6)}', space=smem, size = 0x200, scoped, tag = 'scoped memory for tpu_custom_call.1']
  %s0 = inlined_call_operand.hbm [shape: f32[3,8,384], index: 0, kind: input, shape index: {}]
  %s1 = inlined_call_operand.hbm [shape: f32[3,8,384], index: 1, kind: input, shape index: {}]
  %s2 = inlined_call_operand.vmem [shape: f32[16,8], index: 2, kind: input, shape index: {}]
  %s3 = inlined_call_operand.vmem [shape: f32[16,1], index: 3, kind: input, shape index: {}]
  %s4 = inlined_call_operand.<no memory space> [shape: f32[1], index: 4, kind: input, shape index: {}]
  %s5 = inlined_call_operand.hbm [shape: f32[3,16,16], index: 5, kind: output, shape index: {0}]
  %s6 = inlined_call_operand.hbm [shape: f32[3,16,16], index: 6, kind: output, shape index: {1}]
  %7 = xla_tuple %s5, %s6
  %s8 = sld [smem:[#allocation0]]
  $region77: #{tpu_custom_call.1} parent=0
    _
  %s10 = ssub.s32 1, %s8
  %s11 = scalar_select 0, %s10, %s8
  %12 = sst [smem:[#allocation3]] %s4
  $region1: #{tpu_custom_call.1} parent=0
    #allocation4 [shape = 'u8[8192]{0}', space=vmem, size = 0x2000, scoped, tag = 'input window, operand 0']
    #allocation5 [shape = 's32[2]{0}', space=sflag, size = 0x8, scoped, tag = 'scoped memory for tpu_custom_call.1']
    #allocation6 [shape = 's32[2]{0}', space=sflag, size = 0x8, scoped, tag = 'scoped memory for tpu_custom_call.1']
    #allocation7 [shape = 'u8[8192]{0}', space=vmem, size = 0x2000, scoped, tag = 'input window, operand 1']
    #allocation8 [shape = 's32[2]{0}', space=sflag, size = 0x8, scoped, tag = 'scoped memory for tpu_custom_call.1']
    #allocation9 [shape = 'u8[16384]{0}', space=vmem, size = 0x4000, scoped, tag = 'output window, operand 0']
    #allocation10 [shape = 'u8[16384]{0}', space=vmem, size = 0x4000, scoped, tag = 'output window, operand 1']
    #allocation11 [shape = 's32[2]{0}', space=sflag, size = 0x8, scoped, tag = 'scoped memory for tpu_custom_call.1']
    %13 = vsyncpa [#allocation5], 0
    %s14 = scalar_lea.sflag [#allocation5], 1
    %15 = vsyncpa %s14, 0
    %16 = vsyncpa [#allocation8], 0
    %s17 = scalar_lea.sflag [#allocation8], 1
    %18 = vsyncpa %s17, 0
    %19 = vsyncpa [#allocation6], 0
    %s20 = scalar_lea.sflag [#allocation6], 1
    %21 = vsyncpa %s20, 0
    %22 = vsyncpa [#allocation11], 0
    %s23 = scalar_lea.sflag [#allocation11], 1
    %24 = vsyncpa %s23, 0
    loop: start=0, step=1, limit=11
    $region2: #{tpu_custom_call.1} parent=1 // loop_pre_header
      _
    $region3: #{tpu_custom_call.1} parent=1 // loop_header
      %s26 = sphi 0, %s30
      %p27 = scmp.ge.s32.totalorder %s26, 11
      %s33 = sphi 0, %s45
      %s34 = sphi 0, %s41
      %s35 = sphi 0, %s33
      %s36 = sphi 0, %s34
      %s37 = sphi 0, %s35
      %s38 = sphi 0, %s36
      %s50 = sphi 0, %s52
      %s53 = sphi 0, %s50
      %s54 = sphi 0, %s53
      %s70 = sphi 0, %s54
      %s78 = sphi 0, %s80
      %s81 = sphi 0, %s78
      %s82 = sphi 0, %s81
      %s98 = sphi 0, %s82
      %s102 = sphi 0, %s102
      %s104 = sphi 0, %s102
      %s105 = sphi 0, %s104
      %s119 = sphi 0, %s105
      %s123 = sphi 0, %s123
      %s125 = sphi 0, %s123
      %s126 = sphi 0, %s125
      %s140 = sphi 0, %s126
      %s144 = sphi 0, %s144
      %s146 = sphi 0, %s144
      %s147 = sphi 0, %s146
      %s161 = sphi 0, %s147
      %s167 = sphi 0, %s169
      %s170 = sphi 0, %s167
      %s171 = sphi 0, %s170
      %s187 = sphi 0, %s171
      %s193 = sphi 0, %s195
      %s196 = sphi 0, %s193
      %s197 = sphi 0, %s196
      %s213 = sphi 0, %s197
    $region4: #{tpu_custom_call.1} parent=1 // loop_header_branch
      %29 = sbr.rel (%p27) target = $region8
    $region5: #{tpu_custom_call.1} parent=1 // loop_body
      %s31 = ssub.s32 %s26, 1
      %s32 = ssub.s32 %s26, 2
      %s39 = sadd.s32 1, %s34
      %p40 = scmp.ge.s32.totalorder %s39, 3
      %s41 = scalar_select %p40, 0, %s39
      %s42 = sadd.s32 1, %s33
      %s43 = scalar_select %p40, %s42, %s33
      %p44 = scmp.ge.s32.totalorder %s43, 3
      %s45 = scalar_select %p44, 0, %s43
      %s46 = ssub.s32 %s33, %s45
      %s47 = ssub.s32 %s34, %s41
      %s48 = sor.u32 %s46, %s47
      %p49 = scmp.eq.s32.totalorder %s48, 0
      %s51 = sadd.s32 %s50, 1
      %s52 = scalar_select %p49, %s50, %s51
      %p55 = pneg %p49
      %p56 = scmp.eq.s32.totalorder %s26, 8
      %p57 = por %p55, %p56
      %p58 = scmp.ne.s32.totalorder %s50, %s53
      %p59 = scmp.eq.s32.totalorder %s26, 0
      %p60 = por %p58, %p59
      %p61 = scmp.ne.s32.totalorder %s50, %s53
      %p62 = scmp.eq.s32.totalorder %s31, 8
      %p63 = por %p61, %p62
      %p64 = scmp.ne.s32.totalorder %s53, %s54
      %p65 = scmp.eq.s32.totalorder %s31, 0
      %p66 = por %p64, %p65
      %p67 = scmp.ne.s32.totalorder %s53, %s54
      %p68 = scmp.eq.s32.totalorder %s32, 8
      %p69 = por %p67, %p68
      %p71 = scmp.ne.s32.totalorder %s54, %s70
      %p72 = scmp.eq.s32.totalorder %s32, 0
      %p73 = por %p71, %p72
      %s74 = ssub.s32 %s33, %s45
      %s75 = ssub.s32 %s34, %s41
      %s76 = sor.u32 %s74, %s75
      %p77 = scmp.eq.s32.totalorder %s76, 0
      %s79 = sadd.s32 %s78, 1
      %s80 = scalar_select %p77, %s78, %s79
      %p83 = pneg %p77
      %p84 = scmp.eq.s32.totalorder %s26, 8
      %p85 = por %p83, %p84
      %p86 = scmp.ne.s32.totalorder %s78, %s81
      %p87 = scmp.eq.s32.totalorder %s26, 0
      %p88 = por %p86, %p87
      %p89 = scmp.ne.s32.totalorder %s78, %s81
      %p90 = scmp.eq.s32.totalorder %s31, 8
      %p91 = por %p89, %p90
      %p92 = scmp.ne.s32.totalorder %s81, %s82
      %p93 = scmp.eq.s32.totalorder %s31, 0
      %p94 = por %p92, %p93
      %p95 = scmp.ne.s32.totalorder %s81, %s82
      %p96 = scmp.eq.s32.totalorder %s32, 8
      %p97 = por %p95, %p96
      %p99 = scmp.ne.s32.totalorder %s82, %s98
      %p100 = scmp.eq.s32.totalorder %s32, 0
      %p101 = por %p99, %p100
      %s103 = sadd.s32 %s102, 1
      %p106 = scmp.eq.s32.totalorder %s26, 8
      %p107 = scmp.ne.s32.totalorder %s102, %s104
      %p108 = scmp.eq.s32.totalorder %s26, 0
      %p109 = por %p107, %p108
      %p110 = scmp.ne.s32.totalorder %s102, %s104
      %p111 = scmp.eq.s32.totalorder %s31, 8
      %p112 = por %p110, %p111
      %p113 = scmp.ne.s32.totalorder %s104, %s105
      %p114 = scmp.eq.s32.totalorder %s31, 0
      %p115 = por %p113, %p114
      %p116 = scmp.ne.s32.totalorder %s104, %s105
      %p117 = scmp.eq.s32.totalorder %s32, 8
      %p118 = por %p116, %p117
      %p120 = scmp.ne.s32.totalorder %s105, %s119
      %p121 = scmp.eq.s32.totalorder %s32, 0
      %p122 = por %p120, %p121
      %s124 = sadd.s32 %s123, 1
      %p127 = scmp.eq.s32.totalorder %s26, 8
      %p128 = scmp.ne.s32.totalorder %s123, %s125
      %p129 = scmp.eq.s32.totalorder %s26, 0
      %p130 = por %p128, %p129
      %p131 = scmp.ne.s32.totalorder %s123, %s125
      %p132 = scmp.eq.s32.totalorder %s31, 8
      %p133 = por %p131, %p132
      %p134 = scmp.ne.s32.totalorder %s125, %s126
      %p135 = scmp.eq.s32.totalorder %s31, 0
      %p136 = por %p134, %p135
      %p137 = scmp.ne.s32.totalorder %s125, %s126
      %p138 = scmp.eq.s32.totalorder %s32, 8
      %p139 = por %p137, %p138
      %p141 = scmp.ne.s32.totalorder %s126, %s140
      %p142 = scmp.eq.s32.totalorder %s32, 0
      %p143 = por %p141, %p142
      %s145 = sadd.s32 %s144, 1
      %p148 = scmp.eq.s32.totalorder %s26, 8
      %p149 = scmp.ne.s32.totalorder %s144, %s146
      %p150 = scmp.eq.s32.totalorder %s26, 0
      %p151 = por %p149, %p150
      %p152 = scmp.ne.s32.totalorder %s144, %s146
      %p153 = scmp.eq.s32.totalorder %s31, 8
      %p154 = por %p152, %p153
      %p155 = scmp.ne.s32.totalorder %s146, %s147
      %p156 = scmp.eq.s32.totalorder %s31, 0
      %p157 = por %p155, %p156
      %p158 = scmp.ne.s32.totalorder %s146, %s147
      %p159 = scmp.eq.s32.totalorder %s32, 8
      %p160 = por %p158, %p159
      %p162 = scmp.ne.s32.totalorder %s147, %s161
      %p163 = scmp.eq.s32.totalorder %s32, 0
      %p164 = por %p162, %p163
      %s165 = ssub.s32 %s33, %s45
      %p166 = scmp.eq.s32.totalorder %s165, 0
      %s168 = sadd.s32 %s167, 1
      %s169 = scalar_select %p166, %s167, %s168
      %p172 = pneg %p166
      %p173 = scmp.eq.s32.totalorder %s26, 8
      %p174 = por %p172, %p173
      %p175 = scmp.ne.s32.totalorder %s167, %s170
      %p176 = scmp.eq.s32.totalorder %s26, 0
      %p177 = por %p175, %p176
      %p178 = scmp.ne.s32.totalorder %s167, %s170
      %p179 = scmp.eq.s32.totalorder %s31, 8
      %p180 = por %p178, %p179
      %p181 = scmp.ne.s32.totalorder %s170, %s171
      %p182 = scmp.eq.s32.totalorder %s31, 0
      %p183 = por %p181, %p182
      %p184 = scmp.ne.s32.totalorder %s170, %s171
      %p185 = scmp.eq.s32.totalorder %s32, 8
      %p186 = por %p184, %p185
      %p188 = scmp.ne.s32.totalorder %s171, %s187
      %p189 = scmp.eq.s32.totalorder %s32, 0
      %p190 = por %p188, %p189
      %s191 = ssub.s32 %s33, %s45
      %p192 = scmp.eq.s32.totalorder %s191, 0
      %s194 = sadd.s32 %s193, 1
      %s195 = scalar_select %p192, %s193, %s194
      %p198 = pneg %p192
      %p199 = scmp.eq.s32.totalorder %s26, 8
      %p200 = por %p198, %p199
      %p201 = scmp.ne.s32.totalorder %s193, %s196
      %p202 = scmp.eq.s32.totalorder %s26, 0
      %p203 = por %p201, %p202
      %p204 = scmp.ne.s32.totalorder %s193, %s196
      %p205 = scmp.eq.s32.totalorder %s31, 8
      %p206 = por %p204, %p205
      %p207 = scmp.ne.s32.totalorder %s196, %s197
      %p208 = scmp.eq.s32.totalorder %s31, 0
      %p209 = por %p207, %p208
      %p210 = scmp.ne.s32.totalorder %s196, %s197
      %p211 = scmp.eq.s32.totalorder %s32, 8
      %p212 = por %p210, %p211
      %p214 = scmp.ne.s32.totalorder %s197, %s213
      %p215 = scmp.eq.s32.totalorder %s32, 0
      %p216 = por %p214, %p215
      %p217 = scmp.le.s32.totalorder 1, %s26
      %p218 = scmp.lt.s32.totalorder %s26, 10
      %p219 = pnand %p217, %p218
      %p220 = pneg %p219
      // Predicated region
      $region9: #{tpu_custom_call.1} parent=5 // pred_check
        _
      $region10: #{tpu_custom_call.1} parent=5 // pred_check_branch
        %222 = sbr.rel (%p219) target = $region12
      $region11: #{tpu_custom_call.1} parent=5 // pred_region
        %s223 = ssub.s32 %s26, 1
        // Predicated region
        $region13: #{tpu_custom_call.1} parent=11 // pred_check
          %p224 = pneg %p115
        $region14: #{tpu_custom_call.1} parent=11 // pred_check_branch
          %226 = sbr.rel (%p224) target = $region16
        $region15: #{tpu_custom_call.1} parent=11 // pred_region
          _
        $region16: #{tpu_custom_call.1} parent=11 // pred_fallthru
          _
        // Predicated region
        $region17: #{tpu_custom_call.1} parent=11 // pred_check
          %p227 = pneg %p136
        $region18: #{tpu_custom_call.1} parent=11 // pred_check_branch
          %229 = sbr.rel (%p227) target = $region20
        $region19: #{tpu_custom_call.1} parent=11 // pred_region
          _
        $region20: #{tpu_custom_call.1} parent=11 // pred_fallthru
          _
        // Predicated region
        $region21: #{tpu_custom_call.1} parent=11 // pred_check
          %p230 = pneg %p157
        $region22: #{tpu_custom_call.1} parent=11 // pred_check_branch
          %232 = sbr.rel (%p230) target = $region24
        $region23: #{tpu_custom_call.1} parent=11 // pred_region
          _
        $region24: #{tpu_custom_call.1} parent=11 // pred_fallthru
          _
      $region12: #{tpu_custom_call.1} parent=5 // pred_fallthru
        _
      %p233 = scmp.lt.s32.totalorder %s26, 9
      // Predicated region
      $region25: #{tpu_custom_call.1} parent=5 // pred_check
        %p234 = pneg %p233
      $region26: #{tpu_custom_call.1} parent=5 // pred_check_branch
        %236 = sbr.rel (%p234) target = $region28
      $region27: #{tpu_custom_call.1} parent=5 // pred_region
        // Predicated region
        $region29: #{tpu_custom_call.1} parent=27 // pred_check
          %p237 = pneg %p60
        $region30: #{tpu_custom_call.1} parent=27 // pred_check_branch
          %239 = sbr.rel (%p237) target = $region32
        $region31: #{tpu_custom_call.1} parent=27 // pred_region
          %s240 = sand.u32 %s50, 1
          %s241 = scalar_lea.sflag [#allocation5], %s240
          %s242 = sand.u32 %s50, 1
          %s243 = smul.addr %s242, 8
          %s244 = scalar_lea.vmem [#allocation4], %s243
          %s246 = ssub.s32 128, 128
          %247 = vsyncadd %s241, %s246
          %s248 = smul.addr %s33, 3
          %s249 = sadd.s32 %s34, %s248
          %s250 = smul.addr %s249, 128
          %s251 = scalar_lea.hbm %s0, %s250
          %s253 = sshll.u32 %s244, 4
          %s254 = int_to_ptr.vmem [resolvable:$true] %s253
          %256 = dma.hbm_to_vmem [thread:$0]  %s251, 128, %s254, %s241
        $region32: #{tpu_custom_call.1} parent=27 // pred_fallthru
          _
        // Predicated region
        $region33: #{tpu_custom_call.1} parent=27 // pred_check
          %p257 = pneg %p88
        $region34: #{tpu_custom_call.1} parent=27 // pred_check_branch
          %259 = sbr.rel (%p257) target = $region36
        $region35: #{tpu_custom_call.1} parent=27 // pred_region
          %s260 = sand.u32 %s78, 1
          %s261 = scalar_lea.sflag [#allocation8], %s260
          %s262 = sand.u32 %s78, 1
          %s263 = smul.addr %s262, 8
          %s264 = scalar_lea.vmem [#allocation7], %s263
          %s266 = ssub.s32 128, 128
          %267 = vsyncadd %s261, %s266
          %s268 = smul.addr %s33, 3
          %s269 = sadd.s32 %s34, %s268
          %s270 = smul.addr %s269, 128
          %s271 = scalar_lea.hbm %s1, %s270
          %s273 = sshll.u32 %s264, 4
          %s274 = int_to_ptr.vmem [resolvable:$true] %s273
          %276 = dma.hbm_to_vmem [thread:$0]  %s271, 128, %s274, %s261
        $region36: #{tpu_custom_call.1} parent=27 // pred_fallthru
          _
      $region28: #{tpu_custom_call.1} parent=5 // pred_fallthru
        _
      %p277 = scmp.le.s32.totalorder 1, %s26
      %p278 = scmp.lt.s32.totalorder %s26, 10
      %p279 = pnand %p277, %p278
      %p280 = pneg %p279
      // Predicated region
      $region37: #{tpu_custom_call.1} parent=5 // pred_check
        _
      $region38: #{tpu_custom_call.1} parent=5 // pred_check_branch
        %282 = sbr.rel (%p279) target = $region40
      $region39: #{tpu_custom_call.1} parent=5 // pred_region
        %s283 = ssub.s32 %s26, 1
        %s284 = sand.u32 %s53, 1
        %s285 = scalar_lea.sflag [#allocation5], %s284
        %s286 = sand.u32 %s53, 1
        %s287 = smul.addr %s286, 8
        %s288 = scalar_lea.vmem [#allocation4], %s287
        // Predicated region
        $region41: #{tpu_custom_call.1} parent=39 // pred_check
          %p289 = pneg %p66
        $region42: #{tpu_custom_call.1} parent=39 // pred_check_branch
          %291 = sbr.rel (%p289) target = $region44
        $region43: #{tpu_custom_call.1} parent=39 // pred_region
          %292 = dma.done %s285, 128
        $region44: #{tpu_custom_call.1} parent=39 // pred_fallthru
          _
        %s293 = sand.u32 %s81, 1
        %s294 = scalar_lea.sflag [#allocation8], %s293
        %s295 = sand.u32 %s81, 1
        %s296 = smul.addr %s295, 8
        %s297 = scalar_lea.vmem [#allocation7], %s296
        // Predicated region
        $region45: #{tpu_custom_call.1} parent=39 // pred_check
          %p298 = pneg %p94
        $region46: #{tpu_custom_call.1} parent=39 // pred_check_branch
          %300 = sbr.rel (%p298) target = $region48
        $region47: #{tpu_custom_call.1} parent=39 // pred_region
          %301 = dma.done %s294, 128
        $region48: #{tpu_custom_call.1} parent=39 // pred_fallthru
          _
        %s302 = sand.u32 %s53, 1
        %s303 = scalar_lea.sflag [#allocation5], %s302
        %s304 = sand.u32 %s53, 1
        %s305 = smul.addr %s304, 8
        %s306 = scalar_lea.vmem [#allocation4], %s305
        %p307 = pneg %p66
        %p308 = pneg %p63
        %s309 = sand.u32 %s81, 1
        %s310 = scalar_lea.sflag [#allocation8], %s309
        %s311 = sand.u32 %s81, 1
        %s312 = smul.addr %s311, 8
        %s313 = scalar_lea.vmem [#allocation7], %s312
        %p314 = pneg %p94
        %p315 = pneg %p91
        %p316 = pneg %p115
        %p317 = pneg %p112
        %p318 = pneg %p136
        %p319 = pneg %p133
        %p320 = pneg %p157
        %p321 = pneg %p154
        %p322 = pneg %p183
        %p323 = pneg %p180
        %s324 = sand.u32 %s170, 1
        %s325 = scalar_lea.sflag [#allocation6], %s324
        %s326 = sand.u32 %s170, 1
        %s327 = smul.addr %s326, 16
        %s328 = scalar_lea.vmem [#allocation9], %s327
        %p329 = pneg %p209
        %p330 = pneg %p206
        %s331 = sand.u32 %s196, 1
        %s332 = scalar_lea.sflag [#allocation11], %s331
        %s333 = sand.u32 %s196, 1
        %s334 = smul.addr %s333, 16
        %s335 = scalar_lea.vmem [#allocation10], %s334
        %p336 = scmp.eq.s32.totalorder %s36, 0
        // Predicated region
        $region49: #{tpu_custom_call.1} parent=39 // pred_check
          %p337 = pneg %p336
        $region50: #{tpu_custom_call.1} parent=39 // pred_check_branch
          %339 = sbr.rel (%p337) target = $region52
        $region51: #{tpu_custom_call.1} parent=39 // pred_region
          %vm340 = vcmask 130048
          %341 = vst.msk [vmem:[#allocation2] sm:$0xff] %vm340, 0.0
          %342 = vst.msk [vmem:[#allocation2 + $0x8] sm:$0xff] %vm340, 0.0
        $region52: #{tpu_custom_call.1} parent=39 // pred_fallthru
          _
        %v343 = vld [vmem:[%s2] sm:$0xff]
        %v344 = vld [vmem:[%s2 + $0x8] sm:$0xff]
        %v345 = vld [vmem:[%s3] sm:$0xff]
        %v346 = vld [vmem:[%s3 + $0x8] sm:$0xff]
        %v347 = vld [vmem:[%s288] sm:$0xff]
        %v348 = vld [vmem:[%s297] sm:$0xff]
        %350 = vset.pattern.permute.xlu0 0
        %351 = vperm.xlu0 %350, %v345
        %v352 = vpop.permute.xlu0 %351
        %355 = vset.pattern.permute.xlu0 0
        %356 = vperm.xlu0 %355, %v346
        %v357 = vpop.permute.xlu0 %356
        %vm359 = vcmask 64512
        %v361 = vsel %vm359, %v343, 0
        %v364 = vsel %vm359, %v344, 0
        %366 = vmatprep.subr.mxu0 0.0
        %367 = vmatpush1.msra.mxu0 %v347
        %368 = vmatprep.subr.mxu0 0.0
        %369 = vmatpush1.msra.mxu0 0.0
        %370 = vmatprep.subr.mxu0 0.0
        %371 = vmatpush1.msra.mxu0 0.0
        %372 = vmatprep.subr.mxu0 0.0
        %373 = vmatpush1.msra.mxu0 0.0
        %374 = vmatprep.subr.mxu0 0.0
        %375 = vmatpush1.msra.mxu0 0.0
        %376 = vmatprep.subr.mxu0 0.0
        %377 = vmatpush1.msra.mxu0 0.0
        %378 = vmatprep.subr.mxu0 0.0
        %379 = vmatpush1.msra.mxu0 0.0
        %380 = vmatprep.subr.mxu0 0.0
        %381 = vmatpush1.msra.mxu0 0.0
        %382 = vmatprep.subr.mxu0 0.0
        %383 = vmatpush1.msra.mxu0 0.0
        %384 = vmatprep.subr.mxu0 0.0
        %385 = vmatpush1.msra.mxu0 0.0
        %386 = vmatprep.subr.mxu0 0.0
        %387 = vmatpush1.msra.mxu0 0.0
        %388 = vmatprep.subr.mxu0 0.0
        %389 = vmatpush1.msra.mxu0 0.0
        %390 = vmatprep.subr.mxu0 0.0
        %391 = vmatpush1.msra.mxu0 0.0
        %392 = vmatprep.subr.mxu0 0.0
        %393 = vmatpush1.msra.mxu0 0.0
        %394 = vmatprep.subr.mxu0 0.0
        %395 = vmatpush1.msra.mxu0 0.0
        %396 = vmatprep.subr.mxu0 0.0
        %397 = vmatpush1.msra.mxu0 0.0
        %398 = vmatprep.subr.mxu0 0.0
        %399 = vmatpush1.msra.mxu0 0.0
        %400 = vmatprep.subr.mxu0 0.0
        %401 = vmatpush1.msra.mxu0 0.0
        %402 = vmatprep.subr.mxu0 0.0
        %403 = vmatpush1.msra.mxu0 0.0
        %404 = vmatprep.subr.mxu0 0.0
        %405 = vmatpush1.msra.mxu0 0.0
        %406 = vmatprep.subr.mxu0 0.0
        %407 = vmatpush1.msra.mxu0 0.0
        %408 = vmatprep.subr.mxu0 0.0
        %409 = vmatpush1.msra.mxu0 0.0
        %410 = vmatprep.subr.mxu0 0.0
        %411 = vmatpush1.msra.mxu0 0.0
        %412 = vmatprep.subr.mxu0 0.0
        %413 = vmatpush1.msra.mxu0 0.0
        %414 = vmatprep.subr.mxu0 0.0
        %415 = vmatpush1.msra.mxu0 0.0
        %416 = vmatprep.subr.mxu0 0.0
        %417 = vmatpush1.msra.mxu0 0.0
        %418 = vmatprep.subr.mxu0 0.0
        %419 = vmatpush1.msra.mxu0 0.0
        %420 = vmatprep.subr.mxu0 0.0
        %421 = vmatpush1.msra.mxu0 0.0
        %422 = vmatprep.subr.mxu0 0.0
        %423 = vmatpush1.msra.mxu0 0.0
        %424 = vmatprep.subr.mxu0 0.0
        %425 = vmatpush1.msra.mxu0 0.0
        %426 = vmatprep.subr.mxu0 0.0
        %427 = vmatpush1.msra.mxu0 0.0
        %428 = vmatprep.subr.mxu0 0.0
        %429 = vmatpush1.msra.mxu0 0.0
        %430 = vmatprep.mubr.f32.mxu0 0.0
        %431 = vmatmul.mubr.f32.gmra.mrb[0].mxu0 %v361
        %v432 = vpop.f32.mrb[0].mxu0
        %v433 = vadd.f32 %v352, %v432
        %v434 = vpop.f32.mrb[0].mxu0
        %435 = vmatprep.mubr.f32.mxu0 0.0
        %436 = vmatmul.mubr.f32.gmra.mrb[0].mxu0 %v364
        %v437 = vpop.f32.mrb[0].mxu0
        %v438 = vadd.f32 %v357, %v437
        %v439 = vpop.f32.mrb[0].mxu0
        %440 = vdwg.mxu0
        %v441 = vand.u32 2147483647, %v433
        %v442 = vand.u32 2147483647, %v438
        %v443 = vsub.f32 0.0, %v441
        %v444 = vsub.f32 0.0, %v442
        %v445 = vmul.f32 %v443, 1.442695
        %v446 = vpow.pop %v445
        %v447 = vmul.f32 %v444, 1.442695
        %v448 = vpow.pop %v447
        %v449 = vmul.f32 %v446, %v446
        %v450 = vmul.f32 %v448, %v448
        %vm451 = vcmp.gt.f32.partialorder %v433, 0.0
        %vm452 = vcmp.gt.f32.partialorder %v438, 0.0
        %v453 = vmul.f32 %v446, 2.0
        %v454 = vmul.f32 %v448, 2.0
        %v455 = vadd.f32 %v453, 1.0
        %v456 = vadd.f32 %v454, 1.0
        %v457 = vadd.f32 %v453, %v449
        %v458 = vadd.f32 %v454, %v450
        %v459 = vsel %vm451, %v455, %v457
        %v460 = vsel %vm452, %v456, %v458
        %v461 = vmul.f32 %v449, 2.0
        %v462 = vmul.f32 %v450, 2.0
        %v463 = vadd.f32 %v455, %v461
        %v464 = vadd.f32 %v456, %v462
        %v465 = vadd.f32 %v453, 2.0
        %v466 = vadd.f32 %v454, 2.0
        %v467 = vadd.f32 %v465, %v449
        %v468 = vadd.f32 %v466, %v450
        %v469 = vsel %vm451, %v463, %v467
        %v470 = vsel %vm452, %v464, %v468
        %v471 = vmul.f32 %v433, %v459
        %v472 = vmul.f32 %v438, %v460
        %v473 = vrcp.pop %v469
        %v474 = vrcp.pop %v470
        %v475 = vmul.f32 %v469, %v473
        %v476 = vmul.f32 %v470, %v474
        %v477 = vsub.f32 2.0, %v475
        %v478 = vsub.f32 2.0, %v476
        %v479 = vmul.f32 %v473, %v477
        %v480 = vmul.f32 %v474, %v478
        %v481 = vmul.f32 %v471, %v479
        %v482 = vmul.f32 %v472, %v480
        %483 = vmatprep.subr.mxu0 0.0
        %484 = vmatpush1.msra.mxu0 %v348
        %485 = vmatprep.subr.mxu0 0.0
        %486 = vmatpush1.msra.mxu0 0.0
        %487 = vmatprep.subr.mxu0 0.0
        %488 = vmatpush1.msra.mxu0 0.0
        %489 = vmatprep.subr.mxu0 0.0
        %490 = vmatpush1.msra.mxu0 0.0
        %491 = vmatprep.subr.mxu0 0.0
        %492 = vmatpush1.msra.mxu0 0.0
        %493 = vmatprep.subr.mxu0 0.0
        %494 = vmatpush1.msra.mxu0 0.0
        %495 = vmatprep.subr.mxu0 0.0
        %496 = vmatpush1.msra.mxu0 0.0
        %497 = vmatprep.subr.mxu0 0.0
        %498 = vmatpush1.msra.mxu0 0.0
        %499 = vmatprep.subr.mxu0 0.0
        %500 = vmatpush1.msra.mxu0 0.0
        %501 = vmatprep.subr.mxu0 0.0
        %502 = vmatpush1.msra.mxu0 0.0
        %503 = vmatprep.subr.mxu0 0.0
        %504 = vmatpush1.msra.mxu0 0.0
        %505 = vmatprep.subr.mxu0 0.0
        %506 = vmatpush1.msra.mxu0 0.0
        %507 = vmatprep.subr.mxu0 0.0
        %508 = vmatpush1.msra.mxu0 0.0
        %509 = vmatprep.subr.mxu0 0.0
        %510 = vmatpush1.msra.mxu0 0.0
        %511 = vmatprep.subr.mxu0 0.0
        %512 = vmatpush1.msra.mxu0 0.0
        %513 = vmatprep.subr.mxu0 0.0
        %514 = vmatpush1.msra.mxu0 0.0
        %515 = vmatprep.subr.mxu0 0.0
        %516 = vmatpush1.msra.mxu0 0.0
        %517 = vmatprep.subr.mxu0 0.0
        %518 = vmatpush1.msra.mxu0 0.0
        %519 = vmatprep.subr.mxu0 0.0
        %520 = vmatpush1.msra.mxu0 0.0
        %521 = vmatprep.subr.mxu0 0.0
        %522 = vmatpush1.msra.mxu0 0.0
        %523 = vmatprep.subr.mxu0 0.0
        %524 = vmatpush1.msra.mxu0 0.0
        %525 = vmatprep.subr.mxu0 0.0
        %526 = vmatpush1.msra.mxu0 0.0
        %527 = vmatprep.subr.mxu0 0.0
        %528 = vmatpush1.msra.mxu0 0.0
        %529 = vmatprep.subr.mxu0 0.0
        %530 = vmatpush1.msra.mxu0 0.0
        %531 = vmatprep.subr.mxu0 0.0
        %532 = vmatpush1.msra.mxu0 0.0
        %533 = vmatprep.subr.mxu0 0.0
        %534 = vmatpush1.msra.mxu0 0.0
        %535 = vmatprep.subr.mxu0 0.0
        %536 = vmatpush1.msra.mxu0 0.0
        %537 = vmatprep.subr.mxu0 0.0
        %538 = vmatpush1.msra.mxu0 0.0
        %539 = vmatprep.subr.mxu0 0.0
        %540 = vmatpush1.msra.mxu0 0.0
        %541 = vmatprep.subr.mxu0 0.0
        %542 = vmatpush1.msra.mxu0 0.0
        %543 = vmatprep.subr.mxu0 0.0
        %544 = vmatpush1.msra.mxu0 0.0
        %545 = vmatprep.subr.mxu0 0.0
        %546 = vmatpush1.msra.mxu0 0.0
        %547 = vmatprep.mubr.f32.mxu0 0.0
        %548 = vmatmul.mubr.f32.gmra.mrb[0].mxu0 %v361
        %v549 = vpop.f32.mrb[0].mxu0
        %v550 = vadd.f32 %v352, %v549
        %v551 = vpop.f32.mrb[0].mxu0
        %552 = vmatprep.mubr.f32.mxu0 0.0
        %553 = vmatmul.mubr.f32.gmra.mrb[0].mxu0 %v364
        %v554 = vpop.f32.mrb[0].mxu0
        %v555 = vadd.f32 %v357, %v554
        %v556 = vpop.f32.mrb[0].mxu0
        %557 = vdwg.mxu0
        %v558 = vand.u32 2147483647, %v550
        %v559 = vand.u32 2147483647, %v555
        %v560 = vsub.f32 0.0, %v558
        %v561 = vsub.f32 0.0, %v559
        %v562 = vmul.f32 %v560, 1.442695
        %v563 = vpow.pop %v562
        %v564 = vmul.f32 %v561, 1.442695
        %v565 = vpow.pop %v564
        %v566 = vmul.f32 %v563, %v563
        %v567 = vmul.f32 %v565, %v565
        %vm568 = vcmp.gt.f32.partialorder %v550, 0.0
        %vm569 = vcmp.gt.f32.partialorder %v555, 0.0
        %v570 = vmul.f32 %v563, 2.0
        %v571 = vmul.f32 %v565, 2.0
        %v572 = vadd.f32 %v570, 1.0
        %v573 = vadd.f32 %v571, 1.0
        %v574 = vadd.f32 %v570, %v566
        %v575 = vadd.f32 %v571, %v567
        %v576 = vsel %vm568, %v572, %v574
        %v577 = vsel %vm569, %v573, %v575
        %v578 = vmul.f32 %v566, 2.0
        %v579 = vmul.f32 %v567, 2.0
        %v580 = vadd.f32 %v572, %v578
        %v581 = vadd.f32 %v573, %v579
        %v582 = vadd.f32 %v570, 2.0
        %v583 = vadd.f32 %v571, 2.0
        %v584 = vadd.f32 %v582, %v566
        %v585 = vadd.f32 %v583, %v567
        %v586 = vsel %vm568, %v580, %v584
        %v587 = vsel %vm569, %v581, %v585
        %v588 = vmul.f32 %v550, %v576
        %v589 = vmul.f32 %v555, %v577
        %v590 = vrcp.pop %v586
        %v591 = vrcp.pop %v587
        %v592 = vmul.f32 %v586, %v590
        %v593 = vmul.f32 %v587, %v591
        %v594 = vsub.f32 2.0, %v592
        %v595 = vsub.f32 2.0, %v593
        %v596 = vmul.f32 %v590, %v594
        %v597 = vmul.f32 %v591, %v595
        %v598 = vmul.f32 %v588, %v596
        %v599 = vmul.f32 %v589, %v597
        %s600 = smul.u32 %s36, 128
        %v601 = vlaneseq
        %v602 = vand.u32 %v601, 127
        %v603 = vstv %s600
        %v604 = vadd.s32 %v603, %v602
        %vm605 = vcmp.lt.s32.totalorder %v604, 320
        %v606 = vsel %vm605, 1, 0
        %vm607 = vcmp.eq.s32.totalorder %v606, 1
        %v608 = vsel %vm607, %v481, 0.0
        %v609 = vsel %vm607, %v482, 0.0
        %v610 = vsel %vm607, %v598, 0.0
        %v611 = vsel %vm607, %v599, 0.0
        %v612 = vld [vmem:[#allocation2] sm:$0xff]
        %v613 = vld [vmem:[#allocation2 + $0x8] sm:$0xff]
        %614 = vmatprep.subr.mxu0 0.0
        %615 = vmatpush1.xpose.msra.mxu0 %v610
        %616 = vmatprep.subr.mxu0 0.0
        %617 = vmatpush1.xpose.msra.mxu0 %v611
        %618 = vmatprep.subr.mxu0 0.0
        %619 = vmatpush1.xpose.msra.mxu0 0.0
        %620 = vmatprep.subr.mxu0 0.0
        %621 = vmatpush1.xpose.msra.mxu0 0.0
        %622 = vmatprep.subr.mxu0 0.0
        %623 = vmatpush1.xpose.msra.mxu0 0.0
        %624 = vmatprep.subr.mxu0 0.0
        %625 = vmatpush1.xpose.msra.mxu0 0.0
        %626 = vmatprep.subr.mxu0 0.0
        %627 = vmatpush1.xpose.msra.mxu0 0.0
        %628 = vmatprep.subr.mxu0 0.0
        %629 = vmatpush1.xpose.msra.mxu0 0.0
        %630 = vmatprep.subr.mxu0 0.0
        %631 = vmatpush1.xpose.msra.mxu0 0.0
        %632 = vmatprep.subr.mxu0 0.0
        %633 = vmatpush1.xpose.msra.mxu0 0.0
        %634 = vmatprep.subr.mxu0 0.0
        %635 = vmatpush1.xpose.msra.mxu0 0.0
        %636 = vmatprep.subr.mxu0 0.0
        %637 = vmatpush1.xpose.msra.mxu0 0.0
        %638 = vmatprep.subr.mxu0 0.0
        %639 = vmatpush1.xpose.msra.mxu0 0.0
        %640 = vmatprep.subr.mxu0 0.0
        %641 = vmatpush1.xpose.msra.mxu0 0.0
        %642 = vmatprep.subr.mxu0 0.0
        %643 = vmatpush1.xpose.msra.mxu0 0.0
        %644 = vmatprep.subr.mxu0 0.0
        %645 = vmatpush1.xpose.msra.mxu0 0.0
        %646 = vmatprep.subr.mxu0 0.0
        %647 = vmatpush1.xpose.msra.mxu0 0.0
        %648 = vmatprep.subr.mxu0 0.0
        %649 = vmatpush1.xpose.msra.mxu0 0.0
        %650 = vmatprep.subr.mxu0 0.0
        %651 = vmatpush1.xpose.msra.mxu0 0.0
        %652 = vmatprep.subr.mxu0 0.0
        %653 = vmatpush1.xpose.msra.mxu0 0.0
        %654 = vmatprep.subr.mxu0 0.0
        %655 = vmatpush1.xpose.msra.mxu0 0.0
        %656 = vmatprep.subr.mxu0 0.0
        %657 = vmatpush1.xpose.msra.mxu0 0.0
        %658 = vmatprep.subr.mxu0 0.0
        %659 = vmatpush1.xpose.msra.mxu0 0.0
        %660 = vmatprep.subr.mxu0 0.0
        %661 = vmatpush1.xpose.msra.mxu0 0.0
        %662 = vmatprep.subr.mxu0 0.0
        %663 = vmatpush1.xpose.msra.mxu0 0.0
        %664 = vmatprep.subr.mxu0 0.0
        %665 = vmatpush1.xpose.msra.mxu0 0.0
        %666 = vmatprep.subr.mxu0 0.0
        %667 = vmatpush1.xpose.msra.mxu0 0.0
        %668 = vmatprep.subr.mxu0 0.0
        %669 = vmatpush1.xpose.msra.mxu0 0.0
        %670 = vmatprep.subr.mxu0 0.0
        %671 = vmatpush1.xpose.msra.mxu0 0.0
        %672 = vmatprep.subr.mxu0 0.0
        %673 = vmatpush1.xpose.msra.mxu0 0.0
        %674 = vmatprep.subr.mxu0 0.0
        %675 = vmatpush1.xpose.msra.mxu0 0.0
        %676 = vmatprep.subr.mxu0 0.0
        %677 = vmatpush1.xpose.msra.mxu0 0.0
        %678 = vmatprep.mubr.f32.mxu0 0.0
        %679 = vmatmul.mubr.f32.gmra.mrb[0].mxu0 %v608
        %v680 = vpop.f32.mrb[0].mxu0
        %v681 = vadd.f32 0.0, %v680
        %v682 = vpop.f32.mrb[0].mxu0
        %683 = vmatprep.mubr.f32.mxu0 0.0
        %684 = vmatmul.mubr.f32.gmra.mrb[0].mxu0 %v609
        %v685 = vpop.f32.mrb[0].mxu0
        %v686 = vadd.f32 0.0, %v685
        %v687 = vpop.f32.mrb[0].mxu0
        %688 = vdwg.mxu0
        %v689 = vadd.f32 %v612, %v681
        %v690 = vadd.f32 %v613, %v686
        %vm691 = vcmask 130048
        %692 = vst.msk [vmem:[#allocation2] sm:$0xff] %vm691, %v689
        %693 = vst.msk [vmem:[#allocation2 + $0x8] sm:$0xff] %vm691, %v690
        %p694 = scmp.eq.s32.totalorder %s36, 2
        // Predicated region
        $region53: #{tpu_custom_call.1} parent=39 // pred_check
          %p695 = pneg %p694
        $region54: #{tpu_custom_call.1} parent=39 // pred_check_branch
          %697 = sbr.rel (%p695) target = $region56
        $region55: #{tpu_custom_call.1} parent=39 // pred_region
          %v698 = vld [vmem:[#allocation2] sm:$0xff]
          %v699 = vld [vmem:[#allocation2 + $0x8] sm:$0xff]
          %s700 = sld [smem:[#allocation3]]
          %v701 = vsel %vm691, %v698, -inf
          %702 = vmax.xlane.f32.xlu0 %v701
          %v703 = vpop.xlane.xlu0 %702
          %v704 = vsel %vm691, %v699, -inf
          %705 = vmax.xlane.f32.xlu0 %v704
          %v706 = vpop.xlane.xlu0 %705
          %v707 = vsub.f32 %v698, %v703
          %v708 = vsub.f32 %v699, %v706
          %v709 = vmul.f32 %v707, 1.442695
          %v710 = vpow.pop %v709
          %v711 = vmul.f32 %v708, 1.442695
          %v712 = vpow.pop %v711
          %v713 = vstv %s700
          %v714 = vmul.f32 %v713, %v710
          %v715 = vmul.f32 %v713, %v712
          %v716 = vsel %vm691, %v710, 0.0
          %717 = vadd.xlane.f32.xlu0 %v716
          %v718 = vpop.xlane.xlu0 %717
          %v719 = vsel %vm691, %v712, 0.0
          %720 = vadd.xlane.f32.xlu0 %v719
          %v721 = vpop.xlane.xlu0 %720
          %v722 = vrcp.pop %v718
          %v723 = vrcp.pop %v721
          %v724 = vmul.f32 %v718, %v722
          %v725 = vmul.f32 %v721, %v723
          %v726 = vsub.f32 2.0, %v724
          %v727 = vsub.f32 2.0, %v725
          %v728 = vmul.f32 %v722, %v726
          %v729 = vmul.f32 %v723, %v727
          %v730 = vmul.f32 %v714, %v728
          %v731 = vmul.f32 %v715, %v729
          %732 = vst.msk [vmem:[%s328] sm:$0xff] %vm691, %v730
          %733 = vst.msk [vmem:[%s328 + $0x8] sm:$0xff] %vm691, %v731
          %v734 = vmax.f32 %v701, %v704
          %v735 = vrot.slane %v734, 4
          %v736 = vmax.f32 %v734, %v735
          %v737 = vrot.slane %v736, 2
          %v738 = vmax.f32 %v736, %v737
          %v739 = vrot.slane %v738, 1
          %v740 = vmax.f32 %v738, %v739
          %v741 = vsub.f32 %v698, %v740
          %v742 = vsub.f32 %v699, %v740
          %v743 = vmul.f32 %v741, 1.442695
          %v744 = vpow.pop %v743
          %v745 = vmul.f32 %v742, 1.442695
          %v746 = vpow.pop %v745
          %v747 = vmul.f32 %v713, %v744
          %v748 = vmul.f32 %v713, %v746
          %v749 = vsel %vm691, %v744, 0.0
          %v750 = vsel %vm691, %v746, 0.0
          %v751 = vadd.f32 %v749, %v750
          %v752 = vrot.slane %v751, 4
          %v753 = vadd.f32 %v751, %v752
          %v754 = vrot.slane %v753, 2
          %v755 = vadd.f32 %v753, %v754
          %v756 = vrot.slane %v755, 1
          %v757 = vadd.f32 %v755, %v756
          %v758 = vrcp.pop %v757
          %v759 = vmul.f32 %v757, %v758
          %v760 = vsub.f32 2.0, %v759
          %v761 = vmul.f32 %v758, %v760
          %v762 = vmul.f32 %v747, %v761
          %v763 = vmul.f32 %v748, %v761
          %764 = vst.msk [vmem:[%s335] sm:$0xff] %vm691, %v762
          %765 = vst.msk [vmem:[%s335 + $0x8] sm:$0xff] %vm691, %v763
        $region56: #{tpu_custom_call.1} parent=39 // pred_fallthru
          _
        %s766 = sand.u32 %s170, 1
        %s767 = scalar_lea.sflag [#allocation6], %s766
        %s768 = sand.u32 %s170, 1
        %s769 = smul.addr %s768, 16
        %s770 = scalar_lea.vmem [#allocation9], %s769
        %s771 = sand.u32 %s196, 1
        %s772 = scalar_lea.sflag [#allocation11], %s771
        %s773 = sand.u32 %s196, 1
        %s774 = smul.addr %s773, 16
        %s775 = scalar_lea.vmem [#allocation10], %s774
        // Predicated region
        $region57: #{tpu_custom_call.1} parent=39 // pred_check
          %p776 = pneg %p180
        $region58: #{tpu_custom_call.1} parent=39 // pred_check_branch
          %778 = sbr.rel (%p776) target = $region60
        $region59: #{tpu_custom_call.1} parent=39 // pred_region
          %s780 = ssub.s32 256, 256
          %781 = vsyncadd %s767, %s780
          %s782 = smul.addr %s35, 2
          %s783 = smul.addr %s782, 128
          %s784 = scalar_lea.hbm %s5, %s783
          %s785 = sshll.u32 %s770, 4
          %s786 = int_to_ptr.vmem [resolvable:$true] %s785
          %791 = dma.vmem_to_hbm [thread:$0]  %s786, 256, %s784, %s767, 128, 128, 8
        $region60: #{tpu_custom_call.1} parent=39 // pred_fallthru
          _
        // Predicated region
        $region61: #{tpu_custom_call.1} parent=39 // pred_check
          %p792 = pneg %p206
        $region62: #{tpu_custom_call.1} parent=39 // pred_check_branch
          %794 = sbr.rel (%p792) target = $region64
        $region63: #{tpu_custom_call.1} parent=39 // pred_region
          %s796 = ssub.s32 256, 256
          %797 = vsyncadd %s772, %s796
          %s798 = smul.addr %s35, 2
          %s799 = smul.addr %s798, 128
          %s800 = scalar_lea.hbm %s6, %s799
          %s801 = sshll.u32 %s775, 4
          %s802 = int_to_ptr.vmem [resolvable:$true] %s801
          %807 = dma.vmem_to_hbm [thread:$0]  %s802, 256, %s800, %s772, 128, 128, 8
        $region64: #{tpu_custom_call.1} parent=39 // pred_fallthru
          _
      $region40: #{tpu_custom_call.1} parent=5 // pred_fallthru
        _
      %p808 = scmp.le.s32.totalorder 2, %s26
      // Predicated region
      $region65: #{tpu_custom_call.1} parent=5 // pred_check
        %p809 = pneg %p808
      $region66: #{tpu_custom_call.1} parent=5 // pred_check_branch
        %811 = sbr.rel (%p809) target = $region68
      $region67: #{tpu_custom_call.1} parent=5 // pred_region
        %s812 = ssub.s32 %s26, 2
        // Predicated region
        $region69: #{tpu_custom_call.1} parent=67 // pred_check
          %p813 = pneg %p186
        $region70: #{tpu_custom_call.1} parent=67 // pred_check_branch
          %815 = sbr.rel (%p813) target = $region72
        $region71: #{tpu_custom_call.1} parent=67 // pred_region
          %s816 = sand.u32 %s171, 1
          %s817 = scalar_lea.sflag [#allocation6], %s816
          %s818 = sand.u32 %s171, 1
          %s819 = smul.addr %s818, 16
          %s820 = scalar_lea.vmem [#allocation9], %s819
          %821 = dma.done %s817, 256
        $region72: #{tpu_custom_call.1} parent=67 // pred_fallthru
          _
        // Predicated region
        $region73: #{tpu_custom_call.1} parent=67 // pred_check
          %p822 = pneg %p212
        $region74: #{tpu_custom_call.1} parent=67 // pred_check_branch
          %824 = sbr.rel (%p822) target = $region76
        $region75: #{tpu_custom_call.1} parent=67 // pred_region
          %s825 = sand.u32 %s197, 1
          %s826 = scalar_lea.sflag [#allocation11], %s825
          %s827 = sand.u32 %s197, 1
          %s828 = smul.addr %s827, 16
          %s829 = scalar_lea.vmem [#allocation10], %s828
          %830 = dma.done %s826, 256
        $region76: #{tpu_custom_call.1} parent=67 // pred_fallthru
          _
      $region68: #{tpu_custom_call.1} parent=5 // pred_fallthru
        _
    $region6: #{tpu_custom_call.1} parent=1 // loop_footer
      %s30 = sadd.s32 1, %s26
    $region7: #{tpu_custom_call.1} parent=1 // loop_footer_branch
      %25 = sbr.rel target = $region3
    $region8: #{tpu_custom_call.1} parent=1 // loop_exit
      _
    %831 = vsyncpa [#allocation5], 1
    %s832 = scalar_lea.sflag [#allocation5], 1
    %833 = vsyncpa %s832, 1
    %834 = vsyncpa [#allocation8], 1
    %s835 = scalar_lea.sflag [#allocation8], 1
    %836 = vsyncpa %s835, 1
    %837 = vsyncpa [#allocation6], 1
    %s838 = scalar_lea.sflag [#allocation6], 1
    %839 = vsyncpa %s838, 1
    %840 = vsyncpa [#allocation11], 1
    %s841 = scalar_lea.sflag [#allocation11], 1
    %842 = vsyncpa %s841, 1

</llo_original>
